<compile_context>
chip_gen: v6e
topology: v6e:2x2x1
jax: 0.10.0
libtpu: 0.0.40
codegen_flags: <defaults>
</compile_context>

<pallas_src>
import jax
import jax.numpy as jnp
from jax.experimental import pallas as pl
from jax.experimental.pallas import tpu as pltpu


def _round_up(x, m):
    return ((x + m - 1) // m) * m


# ---------------------------------------------------------------------------
# Kernels
# ---------------------------------------------------------------------------
def _embed_onehot_kernel(ids_ref, table_ref, out_ref):
    """Dense gather of T rows via one-hot @ table on the MXU.

    ids_ref   : (1, T, 1) int32 token ids for this block (pipelined VMEM input)
    table_ref : (Vp, Dp)  full padded embedding table, VMEM-resident
                (constant index_map -> crosses HBM once, not once per block)
    out_ref   : (T, Dp)   sublane/lane-dense output block

    The one-hot matmul replaces the previous per-token (1, D) row copies:
    full (8, 128) vregs flow through the MXU / store path instead of
    1-sublane masked vst.msk stores, so the kernel becomes HBM-bound instead
    of vector-store-slot-bound.  Exact: one-hot rows are 0/1, so the f32
    accumulation reproduces the table rows bit-exactly.
    """
    T = out_ref.shape[0]
    Vp = table_ref.shape[0]
    ids = ids_ref[0]                                          # (T, 1) int32
    iota = jax.lax.broadcasted_iota(jnp.int32, (T, Vp), 1)    # (T, Vp)
    onehot = (ids == iota).astype(table_ref.dtype)            # (T, Vp) 0/1
    out_ref[...] = jnp.dot(
        onehot, table_ref[...], preferred_element_type=jnp.float32
    ).astype(out_ref.dtype)


def _embed_take_kernel(ids_ref, table_ref, out_ref):
    """Vectorized gather for vocabularies too large for the one-hot matmul.

    jnp.take on the VMEM-resident table (the documented replacement for a
    dynamic gather) instead of per-row copies.  Only used when Vp exceeds the
    one-hot threshold, so the small-vocab demo never traces this path.
    """
    ids = ids_ref[0][:, 0]                                    # (T,) int32
    out_ref[...] = jnp.take(table_ref[...], ids, axis=0, mode="clip").astype(
        out_ref.dtype
    )


# ---------------------------------------------------------------------------
# Wrapper
# ---------------------------------------------------------------------------
def embedding_lookup(ids, table, *, tokens_per_block=256, onehot_max_vocab=2048):
    """torch.nn.Embedding forward: out[b, s, :] = table[ids[b, s], :]."""
    assert tokens_per_block % 8 == 0, "tokens_per_block must be a multiple of 8"
    B, S = ids.shape
    V, D = table.shape
    N = B * S

    # Lane/sublane-dense padding: D padded to a multiple of 128 so output
    # stores are full-lane `vst` (not masked partial stores); V padded to a
    # multiple of 128 so the one-hot contraction dim is dense.
    Dp = _round_up(D, 128)
    Vp = _round_up(V, 128)

    # T tokens per grid step (multiple of 8 -> sublane-dense output block).
    # Larger default T (256) amortizes the ~0.35 us per-grid-step overhead.
    T = min(tokens_per_block, _round_up(N, 8))
    Np = _round_up(N, T)
    G = Np // T

    flat_ids = ids.reshape(N).astype(jnp.int32)
    if Np != N:
        flat_ids = jnp.pad(flat_ids, (0, Np - N))        # pad with id 0 (valid row)
    # ids are a normal blocked/pipelined VMEM input (NOT a whole-array SMEM
    # scalar prefetch), so SMEM usage stays constant no matter how big B*S is.
    ids_blocks = flat_ids.reshape(G, T, 1)

    table_p = table
    if (Vp, Dp) != (V, D):
        # TODO(synk): production callers should pre-pad the table once at init
        # instead of padding on every forward call.
        table_p = jnp.pad(table, ((0, Vp - V), (0, Dp - D)))

    # Explicit VMEM budget: table (x2, the pipeline double-buffers even a
    # constant-index block) + double-buffered ids / out blocks + slack.
    itemsize = jnp.dtype(table.dtype).itemsize
    table_bytes = Vp * Dp * itemsize
    out_block_bytes = T * Dp * itemsize
    ids_block_bytes = T * 128 * 4                        # (1, T, 1) int32, lane-padded
    needed = 2 * table_bytes + 2 * out_block_bytes + 2 * ids_block_bytes
    vmem_limit = int(min(max(needed + (4 << 20), 32 << 20), 100 << 20))
    # TODO(synk): tables whose double-buffered footprint exceeds the
    # per-generation VMEM budget (esp. 64 MiB per TensorCore on v7x, table
    # duplicated across both cores) need an HBM-resident table
    # (memory_space=pl.ANY) with a ring of manual pltpu.make_async_copy
    # row-gather DMAs; that path is not implemented here.

    kernel = _embed_onehot_kernel if Vp <= onehot_max_vocab else _embed_take_kernel

    out_flat = pl.pallas_call(
        kernel,
        out_shape=jax.ShapeDtypeStruct((Np, Dp), table.dtype),
        grid_spec=pltpu.PrefetchScalarGridSpec(
            num_scalar_prefetch=0,
            grid=(G,),
            in_specs=[
                # Per-step (1, T, 1) id block: sublane-dense (T % 8 == 0),
                # trailing dim of 1 equals the full array dim.
                pl.BlockSpec((1, T, 1), lambda i: (i, 0, 0)),
                # Whole padded table, constant block index -> fetched into
                # VMEM once and kept resident across all token blocks.
                pl.BlockSpec((Vp, Dp), lambda i: (0, 0)),
            ],
            out_specs=pl.BlockSpec((T, Dp), lambda i: (i, 0)),
        ),
        compiler_params=pltpu.CompilerParams(
            # Token blocks are independent -> shard across TensorCores
            # (2x on v7x, neutral on single-TC v5e/v6e).
            dimension_semantics=("parallel",),
            vmem_limit_bytes=vmem_limit,
        ),
    )(ids_blocks, table_p)

    return out_flat[:N, :D].reshape(B, S, D)


class Embedding:
    """JAX/Pallas equivalent of the PyTorch Embedding module."""

    def __init__(self, vocab_size, d_model, key, dtype=jnp.float32):
        # torch.nn.Embedding default init: weight ~ N(0, 1).
        # dtype=jnp.bfloat16 is supported by the same kernel and halves HBM
        # traffic + resident-table footprint for this memory-bound lookup.
        self.weight = jax.random.normal(key, (vocab_size, d_model)).astype(dtype)

    def __call__(self, x):
        return embedding_lookup(x, self.weight)


if __name__ == "__main__":
    vocab_size = 64
    d_model = 32
    batch = 2
    seq = 8

    key = jax.random.PRNGKey(0)
    k_w, k_x = jax.random.split(key)

    model = Embedding(vocab_size, d_model, k_w)
    x = jax.random.randint(k_x, (batch, seq), 0, vocab_size, dtype=jnp.int32)

    out = jax.block_until_ready(model(x))

    # correctness check against plain-JAX gather (exact: one-hot matmul of 0/1)
    ref = model.weight[x]
    assert out.shape == (batch, seq, d_model)
    assert jnp.allclose(out, ref), "Pallas embedding mismatch vs reference gather"

    print("KERNEL_OK")
</pallas_src>

<mosaic_0001>
module attributes {stable_mosaic.version = 11 : i64} {
  func.func @_embed_onehot_kernel(%arg0: i32, %arg1: memref<1x16x1xi32, #tpu.memory_space<vmem>>, %arg2: memref<128x128xf32, #tpu.memory_space<vmem>>, %arg3: memref<16x128xf32, #tpu.memory_space<vmem>>) attributes {dimension_semantics = [#tpu.dimension_semantics<parallel>], iteration_bounds = array<i64: 1>, scalar_prefetch = 0 : i64, scratch_operands = 0 : i64, tpu.core_type = #tpu.core_type<tc>, window_params = [{transform_indices = @transform_0, window_bounds = array<i64: 1, 16, 1>}, {pipeline_mode = #tpu.pipeline_mode<synchronous>, transform_indices = @transform_1, window_bounds = array<i64: 128, 128>}, {transform_indices = @transform_2, window_bounds = array<i64: 16, 128>}]} {
    %c0 = arith.constant 0 : index
    %c0_0 = arith.constant 0 : index
    %c0_1 = arith.constant 0 : index
    %0 = vector.load %arg1[%c0, %c0_0, %c0_1] : memref<1x16x1xi32, #tpu.memory_space<vmem>>, vector<1x16x1xi32>
    %1 = vector.shape_cast %0 : vector<1x16x1xi32> to vector<16x1xi32>
    %2 = tpu.iota {dimensions = array<i32: 1>} : vector<16x128xi32>
    %3 = vector.broadcast %1 : vector<16x1xi32> to vector<16x128xi32>
    %4 = arith.cmpi eq, %3, %2 : vector<16x128xi32>
    %5 = arith.extui %4 : vector<16x128xi1> to vector<16x128xi32>
    %6 = arith.sitofp %5 : vector<16x128xi32> to vector<16x128xf32>
    %c0_2 = arith.constant 0 : index
    %c0_3 = arith.constant 0 : index
    %7 = vector.load %arg2[%c0_2, %c0_3] : memref<128x128xf32, #tpu.memory_space<vmem>>, vector<128x128xf32>
    %cst = arith.constant dense<0.000000e+00> : vector<16x128xf32>
    %8 = tpu.matmul %6, %7, %cst {dimension_numbers = #tpu.dot_dimension_numbers<[1], [0], [0], [1], [0, 0, 1, 1], [], []>} : vector<16x128xf32>, vector<128x128xf32>, vector<16x128xf32> -> vector<16x128xf32>
    %c0_4 = arith.constant 0 : index
    %c0_5 = arith.constant 0 : index
    %9 = vector.load %arg3[%c0_4, %c0_5] : memref<16x128xf32, #tpu.memory_space<vmem>>, vector<16x128xf32>
    tpu.vector_store %arg3[%c0_4, %c0_5], %8 {strides = array<i32>} : memref<16x128xf32, #tpu.memory_space<vmem>>, vector<16x128xf32>,
    return
  }
  func.func @transform_0(%arg0: i32) -> (i32, i32, i32) {
    %c0_i32 = arith.constant 0 : i32
    %c0_i32_0 = arith.constant 0 : i32
    %c0_i32_1 = arith.constant 0 : i32
    return %arg0, %c0_i32, %c0_i32_0 : i32, i32, i32
  }
  func.func @transform_1(%arg0: i32) -> (i32, i32) {
    %c0_i32 = arith.constant 0 : i32
    %c0_i32_0 = arith.constant 0 : i32
    %c0_i32_1 = arith.constant 0 : i32
    return %c0_i32, %c0_i32_0 : i32, i32
  }
  func.func @transform_2(%arg0: i32) -> (i32, i32) {
    %c0_i32 = arith.constant 0 : i32
    %c0_i32_0 = arith.constant 0 : i32
    return %arg0, %c0_i32 : i32, i32
  }
}

</mosaic_0001>

<llo_original>
// kernel: tpu_custom_call.1
$region0: #{tpu_custom_call.1}
  #allocation0 [shape = 'u32[]', space=smem, size = 0x4, offset = 0x4, fixed_abs, tag = 'smem constant byte address 0x4 - core index']
  #allocation1 [shape = 'u32[144,128]{1,0:T(1,128)}', space=vmem, size = 0x12000, scoped, tag = 'internal scratch']
  %s0 = inlined_call_operand.vmem [shape: s32[1,16,1], index: 0, kind: input, shape index: {}]
  %s1 = inlined_call_operand.hbm [shape: f32[128,128], index: 1, kind: input, shape index: {}]
  %s2 = inlined_call_operand.hbm [shape: f32[16,128], index: 2, kind: output, shape index: {}]
  %s3 = sld [smem:[#allocation0]]
  $region22: #{tpu_custom_call.1} parent=0
    _
  %s5 = ssub.s32 1, %s3
  %s6 = scalar_select 0, %s5, %s3
  $region1: #{tpu_custom_call.1} parent=0
    #allocation2 [shape = 'u8[65536]{0}', space=vmem, size = 0x10000, scoped, tag = 'input window, operand 1, single buffered']
    #allocation3 [shape = 's32[1]{0}', space=sflag, size = 0x4, scoped, tag = 'scoped memory for tpu_custom_call.1']
    #allocation4 [shape = 's32[1]{0}', space=sflag, size = 0x4, scoped, tag = 'scoped memory for tpu_custom_call.1']
    #allocation5 [shape = 'u8[8192]{0}', space=vmem, size = 0x2000, scoped, tag = 'output window, operand 0, single buffered']
    %7 = vsyncpa [#allocation3], 0
    %8 = vsyncpa [#allocation4], 0
    // Predicated region
    $region2: #{tpu_custom_call.1} parent=1 // pred_check
      _
    $region3: #{tpu_custom_call.1} parent=1 // pred_check_branch
      %10 = sbr.rel (0) target = $region5
    $region4: #{tpu_custom_call.1} parent=1 // pred_region
      _
    $region5: #{tpu_custom_call.1} parent=1 // pred_fallthru
      _
    // Predicated region
    $region6: #{tpu_custom_call.1} parent=1 // pred_check
      _
    $region7: #{tpu_custom_call.1} parent=1 // pred_check_branch
      %12 = sbr.rel (0) target = $region9
    $region8: #{tpu_custom_call.1} parent=1 // pred_region
      %s14 = ssub.s32 2048, 2048
      %15 = vsyncadd [#allocation3], %s14
      %s16 = sshll.u32 [#allocation2], 4
      %s17 = int_to_ptr.vmem [resolvable:$true] %s16
      %22 = dma.hbm_to_vmem [thread:$0]  %s1, 2048, %s17, [#allocation3], 128, 128, 8
    $region9: #{tpu_custom_call.1} parent=1 // pred_fallthru
      _
    // Predicated region
    $region10: #{tpu_custom_call.1} parent=1 // pred_check
      _
    $region11: #{tpu_custom_call.1} parent=1 // pred_check_branch
      %24 = sbr.rel (0) target = $region13
    $region12: #{tpu_custom_call.1} parent=1 // pred_region
      %25 = dma.done [#allocation3], 2048
    $region13: #{tpu_custom_call.1} parent=1 // pred_fallthru
      _
    %v26 = vld [vmem:[%s0] sm:$0xff]
    %v27 = vld [vmem:[%s0 + $0x8] sm:$0xff]
    %v28 = vlaneseq
    %v29 = vand.u32 %v28, 127
    %30 = vset.pattern.permute.xlu0 0
    %31 = vperm.xlu0 %30, %v26
    %v32 = vpop.permute.xlu0 %31
    %33 = vset.pattern.permute.xlu0 0
    %34 = vperm.xlu0 %33, %v27
    %v35 = vpop.permute.xlu0 %34
    %vm36 = vcmp.eq.s32.totalorder %v32, %v29
    %vm37 = vcmp.eq.s32.totalorder %v35, %v29
    %v38 = vsel %vm36, 1, 0
    %v39 = vsel %vm37, 1, 0
    %v40 = vcvt.s32.f32 %v38
    %v41 = vcvt.s32.f32 %v39
    %v42 = vld [vmem:[#allocation2] sm:$0xff]
    %v43 = vld [vmem:[#allocation2 + $0x8] sm:$0xff]
    %v44 = vld [vmem:[#allocation2 + $0x10] sm:$0xff]
    %v45 = vld [vmem:[#allocation2 + $0x18] sm:$0xff]
    %v46 = vld [vmem:[#allocation2 + $0x20] sm:$0xff]
    %v47 = vld [vmem:[#allocation2 + $0x28] sm:$0xff]
    %v48 = vld [vmem:[#allocation2 + $0x30] sm:$0xff]
    %v49 = vld [vmem:[#allocation2 + $0x38] sm:$0xff]
    %v50 = vld [vmem:[#allocation2 + $0x40] sm:$0xff]
    %v51 = vld [vmem:[#allocation2 + $0x48] sm:$0xff]
    %v52 = vld [vmem:[#allocation2 + $0x50] sm:$0xff]
    %v53 = vld [vmem:[#allocation2 + $0x58] sm:$0xff]
    %v54 = vld [vmem:[#allocation2 + $0x60] sm:$0xff]
    %v55 = vld [vmem:[#allocation2 + $0x68] sm:$0xff]
    %v56 = vld [vmem:[#allocation2 + $0x70] sm:$0xff]
    %v57 = vld [vmem:[#allocation2 + $0x78] sm:$0xff]
    %58 = vmatprep.subr.mxu0 0.0
    %59 = vmatpush1.msra.mxu0 %v57
    %60 = vmatprep.subr.mxu0 0.0
    %61 = vmatpush1.msra.mxu0 %v56
    %62 = vmatprep.subr.mxu0 0.0
    %63 = vmatpush1.msra.mxu0 %v55
    %64 = vmatprep.subr.mxu0 0.0
    %65 = vmatpush1.msra.mxu0 %v54
    %66 = vmatprep.subr.mxu0 0.0
    %67 = vmatpush1.msra.mxu0 %v53
    %68 = vmatprep.subr.mxu0 0.0
    %69 = vmatpush1.msra.mxu0 %v52
    %70 = vmatprep.subr.mxu0 0.0
    %71 = vmatpush1.msra.mxu0 %v51
    %72 = vmatprep.subr.mxu0 0.0
    %73 = vmatpush1.msra.mxu0 %v50
    %74 = vmatprep.subr.mxu0 0.0
    %75 = vmatpush1.msra.mxu0 %v49
    %76 = vmatprep.subr.mxu0 0.0
    %77 = vmatpush1.msra.mxu0 %v48
    %78 = vmatprep.subr.mxu0 0.0
    %79 = vmatpush1.msra.mxu0 %v47
    %80 = vmatprep.subr.mxu0 0.0
    %81 = vmatpush1.msra.mxu0 %v46
    %82 = vmatprep.subr.mxu0 0.0
    %83 = vmatpush1.msra.mxu0 %v45
    %84 = vmatprep.subr.mxu0 0.0
    %85 = vmatpush1.msra.mxu0 %v44
    %86 = vmatprep.subr.mxu0 0.0
    %87 = vmatpush1.msra.mxu0 %v43
    %88 = vmatprep.subr.mxu0 0.0
    %89 = vmatpush1.msra.mxu0 %v42
    %90 = vmatprep.subr.mxu0 0.0
    %91 = vmatpush2.msra.mxu0 0.0
    %92 = vmatprep.subr.mxu0 0.0
    %93 = vmatpush2.msra.mxu0 0.0
    %94 = vmatprep.subr.mxu0 0.0
    %95 = vmatpush2.msra.mxu0 0.0
    %96 = vmatprep.subr.mxu0 0.0
    %97 = vmatpush2.msra.mxu0 0.0
    %98 = vmatprep.subr.mxu0 0.0
    %99 = vmatpush2.msra.mxu0 0.0
    %100 = vmatprep.subr.mxu0 0.0
    %101 = vmatpush2.msra.mxu0 0.0
    %102 = vmatprep.subr.mxu0 0.0
    %103 = vmatpush2.msra.mxu0 0.0
    %104 = vmatprep.subr.mxu0 0.0
    %105 = vmatpush2.msra.mxu0 0.0
    %106 = vmatprep.subr.mxu0 0.0
    %107 = vmatpush2.msra.mxu0 0.0
    %108 = vmatprep.subr.mxu0 0.0
    %109 = vmatpush2.msra.mxu0 0.0
    %110 = vmatprep.subr.mxu0 0.0
    %111 = vmatpush2.msra.mxu0 0.0
    %112 = vmatprep.subr.mxu0 0.0
    %113 = vmatpush2.msra.mxu0 0.0
    %114 = vmatprep.subr.mxu0 0.0
    %115 = vmatpush2.msra.mxu0 0.0
    %116 = vmatprep.subr.mxu0 0.0
    %117 = vmatpush2.msra.mxu0 0.0
    %118 = vmatprep.subr.mxu0 0.0
    %119 = vmatpush2.msra.mxu0 0.0
    %120 = vmatprep.subr.mxu0 0.0
    %121 = vmatpush2.msra.mxu0 0.0
    %122 = vmatprep.mubr.f32.mxu0 0.0
    %123 = vmatmul.mubr.f32.gmra.mxu0 %v40
    %v124 = vpop.f32.mrf.mxu0
    %v125 = vadd.f32 0.0, %v124
    %v126 = vpop.f32.mrf.mxu0
    %127 = vmatprep.mubr.f32.mxu0 0.0
    %128 = vmatmul.mubr.f32.gmra.mxu0 %v41
    %v129 = vpop.f32.mrf.mxu0
    %v130 = vadd.f32 0.0, %v129
    %v131 = vpop.f32.mrf.mxu0
    %132 = vdwg.mxu0
    %133 = vst [vmem:[#allocation5] sm:$0xff] %v125
    %134 = vst [vmem:[#allocation5 + $0x8] sm:$0xff] %v130
    // Predicated region
    $region14: #{tpu_custom_call.1} parent=1 // pred_check
      _
    $region15: #{tpu_custom_call.1} parent=1 // pred_check_branch
      %136 = sbr.rel (0) target = $region17
    $region16: #{tpu_custom_call.1} parent=1 // pred_region
      %s138 = ssub.s32 256, 256
      %139 = vsyncadd [#allocation4], %s138
      %s140 = sshll.u32 [#allocation5], 4
      %s141 = int_to_ptr.vmem [resolvable:$true] %s140
      %146 = dma.vmem_to_hbm [thread:$0]  %s141, 256, %s2, [#allocation4], 128, 128, 8
    $region17: #{tpu_custom_call.1} parent=1 // pred_fallthru
      _
    // Predicated region
    $region18: #{tpu_custom_call.1} parent=1 // pred_check
      _
    $region19: #{tpu_custom_call.1} parent=1 // pred_check_branch
      %148 = sbr.rel (0) target = $region21
    $region20: #{tpu_custom_call.1} parent=1 // pred_region
      %149 = dma.done [#allocation4], 256
    $region21: #{tpu_custom_call.1} parent=1 // pred_fallthru
      _
    %150 = vsyncpa [#allocation3], 1
    %151 = vsyncpa [#allocation4], 1

</llo_original>
